<compile_context>
chip_gen: v5e
topology: v5e:2x2
jax: 0.10.0
libtpu: 0.0.40
codegen_flags: <defaults>
</compile_context>

<pallas_src>
import jax
import jax.numpy as jnp
from jax.experimental import pallas as pl
from jax.experimental.pallas import tpu as pltpu


def _trainer_head_kernel(num_class, lane_dense):
    """Kernel closure; num_class and the narrow-stream layout are static."""

    def kernel(logits_ref, labels_ref, probs_ref, preds_ref, nll_ref):
        # DMA'd in native dtype (bf16 or f32); in-kernel math stays f32.
        x = logits_ref[...].astype(jnp.float32)                       # (TB, D)
        tb, d = x.shape

        # Column-index plane, reused by the label one-hot and the argmax.
        col = jax.lax.broadcasted_iota(jnp.int32, (tb, d), 1)         # (TB, D)

        if lane_dense:
            # Narrow streams are lane-dense (1, TB).  Relayout lane<->sublane with a
            # masked reduction against an identity plane: only iota / compare /
            # where / reduce are used, all guaranteed to lower on TPU.
            eye = (jax.lax.broadcasted_iota(jnp.int32, (tb, tb), 0) ==
                   jax.lax.broadcasted_iota(jnp.int32, (tb, tb), 1))   # (TB, TB)
            labels = jnp.sum(jnp.where(eye, labels_ref[...], 0),
                             axis=1, keepdims=True)                    # (TB, 1)
        else:
            labels = labels_ref[...]                                   # (TB, 1)

        # ---- softmax over the full logit dim (log_sample_score) ----
        m = jnp.max(x, axis=-1, keepdims=True)                         # (TB, 1)
        e = jnp.exp(x - m)                                             # (TB, D)
        s = jnp.sum(e, axis=-1, keepdims=True)                         # (TB, 1)
        # exact reciprocal (EUP slot, ~free): scores are logged to 4 decimals.
        probs = e * pl.reciprocal(s, approx=False)
        probs_ref[...] = probs.astype(probs_ref.dtype)                 # bf16 out if bf16 in

        # ---- per-row cross-entropy (CrossEntropyLoss numerator); mean over the
        # ---- TOTAL batch B is applied by the caller, so the grid axis stays parallel.
        log_z = m + jnp.log(s)                                         # (TB, 1)
        picked = jnp.sum(jnp.where(col == labels, x, 0.0),
                         axis=-1, keepdims=True)                       # (TB, 1)
        nll = log_z - picked                                           # (TB, 1)

        # ---- predict(): argmax over the first num_class columns; full-width mask
        # ---- instead of an unaligned lane slice (slices are not views on TPU).
        xm = jnp.where(col < num_class, x, -jnp.inf)                   # (TB, D)
        mx = jnp.max(xm, axis=-1, keepdims=True)                       # (TB, 1)
        preds = jnp.min(jnp.where(xm == mx, col, d),
                        axis=-1, keepdims=True)                        # (TB, 1) first max

        if lane_dense:
            preds_ref[...] = jnp.sum(jnp.where(eye, preds, 0), axis=0, keepdims=True)
            nll_ref[...] = jnp.sum(jnp.where(eye, nll, 0.0), axis=0, keepdims=True)
        else:
            preds_ref[...] = preds
            nll_ref[...] = nll

    return kernel


def _vmem_capacity_bytes():
    """Physical VMEM per TensorCore, with a device_kind-based fallback."""
    try:
        return int(pltpu.get_tpu_info().vmem_capacity_bytes)
    except Exception:
        kind = ""
        try:
            kind = jax.devices()[0].device_kind.lower()
        except Exception:
            pass
        # v7x has 64 MiB per TensorCore; v5e / v6e have 128 MiB.
        return (64 << 20) if "7" in kind else (128 << 20)


def _tile_plan(batch, logit_dim, in_itemsize):
    """Pick the batch tile TB, padded batch, scoped VMEM limit and stream layout."""
    itemsize = int(in_itemsize)
    # Sublane alignment of the input dtype: f32 -> 8 rows, bf16 -> 16, int8 -> 32.
    row_align = max(8, 32 // max(itemsize, 1))

    phys = _vmem_capacity_bytes()
    vmem_limit = min(phys // 2, 64 << 20)      # scoped request, always leave headroom

    # Per-row VMEM cost of one tile:
    #   * double-buffered I/O: logits in + probs out (input dtype) + three 4-byte
    #     narrow streams (labels / preds / nll),
    #   * ~6 full-width f32 in-kernel intermediates (x, e, col, masked planes, ...).
    io_per_row = 2 * (2 * logit_dim * itemsize + 3 * 4)
    interm_per_row = 6 * logit_dim * 4
    per_row = io_per_row + interm_per_row

    budget = (vmem_limit * 3) // 4             # headroom for compiler scratch/regalloc
    tb = budget // max(per_row, 1)

    # Absolute 512-row cap: keeps the f32 intermediates and the lane-relayout
    # identity plane (TB x TB) small on v7x's 64 MiB VMEM.  For D >= ~512 this still
    # yields >=0.5-2 MiB logit blocks (HBM-roofline plateau); for tiny D the problem
    # is overhead-dominated regardless (see lane-folding TODO above).
    tb = min(tb, 512)
    tb = max(row_align, (tb // row_align) * row_align)

    padded_min = -(-batch // row_align) * row_align
    if padded_min >= 4 * row_align:
        # Guarantee >=2 (prefer >=4) grid steps so v7x's dual TensorCores and the
        # double-buffered DMA pipeline are actually used.
        tb = min(tb, max(row_align, ((padded_min // 4) // row_align) * row_align))
    elif padded_min >= 2 * row_align:
        tb = min(tb, max(row_align, ((padded_min // 2) // row_align) * row_align))
    else:
        tb = min(tb, padded_min)

    # Lane-dense narrow streams need TB % 128 == 0 (or a single grid step).
    if tb >= 128:
        tb = (tb // 128) * 128

    padded = -(-batch // tb) * tb
    lane_dense = (padded == tb) or (tb % 128 == 0)
    return tb, padded, int(vmem_limit), row_align, lane_dense


def trainer_head(logits, labels, num_class, tile_rows=None):
    """Fused softmax / argmax / cross-entropy head of Trainer.

    logits: (B, D) float32 or bfloat16   (D >= num_class; predict() masks to num_class)
    labels: (B,)   integer
    returns: probs (B, D) in logits.dtype, preds (B,) int32, loss () float32
    """
    batch, logit_dim = logits.shape
    # predict() only restricts the argmax when 0 < num_class < width (documented
    # divergence: anything else means "use the full width" here).
    if not (0 < num_class < logit_dim):
        num_class = logit_dim

    in_itemsize = jnp.dtype(logits.dtype).itemsize
    tb, padded, vmem_limit, row_align, lane_dense = _tile_plan(
        batch, logit_dim, in_itemsize)
    if tile_rows is not None:                  # explicit override (tests / tuning)
        tb = max(row_align, (int(tile_rows) // row_align) * row_align)
        padded = -(-batch // tb) * tb
        lane_dense = (padded == tb) or (tb % 128 == 0)

    labels_i32 = labels.astype(jnp.int32)
    pad = padded - batch
    if pad:
        logits = jnp.pad(logits, ((0, pad), (0, 0)))
        labels_i32 = jnp.pad(labels_i32, ((0, pad),))

    grid = (padded // tb,)
    probs_dtype = logits.dtype                 # bf16 in -> bf16 probs (dominant write)

    if lane_dense:
        labels_arr = labels_i32.reshape(1, padded)
        label_spec = pl.BlockSpec((1, tb), lambda i: (0, i))
        narrow_shape = (1, padded)
        preds_spec = pl.BlockSpec((1, tb), lambda i: (0, i))
        nll_spec = pl.BlockSpec((1, tb), lambda i: (0, i))
    else:
        labels_arr = labels_i32.reshape(padded, 1)
        label_spec = pl.BlockSpec((tb, 1), lambda i: (i, 0))
        narrow_shape = (padded, 1)
        preds_spec = pl.BlockSpec((tb, 1), lambda i: (i, 0))
        nll_spec = pl.BlockSpec((tb, 1), lambda i: (i, 0))

    probs, preds, nll = pl.pallas_call(
        _trainer_head_kernel(num_class, lane_dense),
        grid=grid,
        in_specs=[
            pl.BlockSpec((tb, logit_dim), lambda i: (i, 0)),   # logits (native dtype)
            label_spec,                                        # labels
        ],
        out_specs=(
            pl.BlockSpec((tb, logit_dim), lambda i: (i, 0)),   # softmax probs
            preds_spec,                                        # argmax preds
            nll_spec,                                          # per-row NLL partials
        ),
        out_shape=(
            jax.ShapeDtypeStruct((padded, logit_dim), probs_dtype),
            jax.ShapeDtypeStruct(narrow_shape, jnp.int32),
            jax.ShapeDtypeStruct(narrow_shape, jnp.float32),
        ),
        compiler_params=pltpu.CompilerParams(
            dimension_semantics=("parallel",),                 # megacore-shardable
            vmem_limit_bytes=vmem_limit,
        ),
    )(logits, labels_arr)

    # Drop padded rows so they never touch the outputs / the mean loss.
    if lane_dense:
        preds_v = preds[0, :batch]
        nll_v = nll[0, :batch]
    else:
        preds_v = preds[:batch, 0]
        nll_v = nll[:batch, 0]
    if pad:
        probs = probs[:batch]

    # Mean over the TOTAL batch (matches nn.CrossEntropyLoss reduction='mean').
    loss = jnp.sum(nll_v) / jnp.float32(batch)
    return probs, preds_v, loss


def _reference(logits_f32, labels, num_class):
    """Pure-JAX reference reproducing the PyTorch semantics."""
    d = logits_f32.shape[-1]
    if not (0 < num_class < d):
        num_class = d
    probs = jax.nn.softmax(logits_f32, axis=-1)
    preds = jnp.argmax(logits_f32[:, :num_class], axis=-1).astype(jnp.int32)
    log_z = jax.nn.logsumexp(logits_f32, axis=-1)
    picked = jnp.take_along_axis(logits_f32, labels[:, None], axis=-1)[:, 0]
    loss = jnp.mean(log_z - picked)
    return probs, preds, loss


if __name__ == "__main__":
    key = jax.random.PRNGKey(0)

    def run_case(case_key, batch, logit_dim, num_class, dtype, tile_rows, name):
        k1, k2 = jax.random.split(case_key)
        logits = jax.random.normal(k1, (batch, logit_dim), dtype=jnp.float32).astype(dtype)
        labels = jax.random.randint(k2, (batch,), 0, logit_dim, dtype=jnp.int32)

        probs, preds, loss = trainer_head(logits, labels, num_class, tile_rows=tile_rows)
        jax.block_until_ready((probs, preds, loss))

        rp, rd, rl = _reference(logits.astype(jnp.float32), labels, num_class)
        ptol = 1e-2 if probs.dtype == jnp.bfloat16 else 1e-5
        assert probs.shape == (batch, logit_dim), f"{name}: probs shape"
        assert preds.shape == (batch,), f"{name}: preds shape"
        assert jnp.allclose(probs.astype(jnp.float32), rp, atol=ptol, rtol=ptol), \
            f"{name}: probs mismatch"
        assert jnp.array_equal(preds, rd), f"{name}: preds mismatch"
        assert jnp.allclose(loss, rl, atol=1e-4, rtol=1e-4), f"{name}: loss mismatch"

    keys = jax.random.split(key, 3)
    # 1) tiny bf16 batch: single grid step, lane-dense narrow streams, bf16 probs out.
    run_case(keys[0], 8, 4, 2, jnp.bfloat16, None, "tiny-bf16")
    # 2) multi-tile remainder batch with a tile that is NOT a multiple of 128:
    #    exercises the sublane-layout fallback for the narrow streams + padding path.
    run_case(keys[1], 20, 4, 2, jnp.bfloat16, 16, "multi-tile-sublane")
    # 3) multi-tile f32 batch with TB=128: exercises the lane-dense multi-step path.
    run_case(keys[2], 256, 8, 2, jnp.float32, 128, "multi-tile-lane-dense")

    print("KERNEL_OK")
</pallas_src>

<mosaic_0001>
module attributes {stable_mosaic.version = 11 : i64} {
  func.func @kernel(%arg0: i32, %arg1: memref<16x4xbf16, #tpu.memory_space<vmem>>, %arg2: memref<1x16xi32, #tpu.memory_space<vmem>>, %arg3: memref<16x4xbf16, #tpu.memory_space<vmem>>, %arg4: memref<1x16xi32, #tpu.memory_space<vmem>>, %arg5: memref<1x16xf32, #tpu.memory_space<vmem>>) attributes {dimension_semantics = [#tpu.dimension_semantics<parallel>], iteration_bounds = array<i64: 1>, scalar_prefetch = 0 : i64, scratch_operands = 0 : i64, tpu.core_type = #tpu.core_type<tc>, window_params = [{transform_indices = @transform_0, window_bounds = array<i64: 16, 4>}, {transform_indices = @transform_1, window_bounds = array<i64: 1, 16>}, {transform_indices = @transform_2, window_bounds = array<i64: 16, 4>}, {transform_indices = @transform_3, window_bounds = array<i64: 1, 16>}, {transform_indices = @transform_4, window_bounds = array<i64: 1, 16>}]} {
    %c0 = arith.constant 0 : index
    %c0_0 = arith.constant 0 : index
    %0 = vector.load %arg1[%c0, %c0_0] : memref<16x4xbf16, #tpu.memory_space<vmem>>, vector<16x4xbf16>
    %1 = arith.extf %0 : vector<16x4xbf16> to vector<16x4xf32>
    %2 = tpu.iota {dimensions = array<i32: 1>} : vector<16x4xi32>
    %3 = tpu.iota {dimensions = array<i32: 0>} : vector<16x16xi32>
    %4 = tpu.iota {dimensions = array<i32: 1>} : vector<16x16xi32>
    %5 = arith.cmpi eq, %3, %4 : vector<16x16xi32>
    %c0_1 = arith.constant 0 : index
    %c0_2 = arith.constant 0 : index
    %6 = vector.load %arg2[%c0_1, %c0_2] : memref<1x16xi32, #tpu.memory_space<vmem>>, vector<1x16xi32>
    %c0_i32 = arith.constant 0 : i32
    %7 = vector.shape_cast %6 : vector<1x16xi32> to vector<1x16xi32>
    %8 = vector.broadcast %7 : vector<1x16xi32> to vector<16x16xi32>
    %9 = vector.broadcast %c0_i32 : i32 to vector<16x16xi32>
    %10 = arith.select %5, %8, %9 : vector<16x16xi1>, vector<16x16xi32>
    %cst = arith.constant dense<0> : vector<16xi32>
    %11 = vector.multi_reduction <add>, %10, %cst [1] : vector<16x16xi32> to vector<16xi32>
    %12 = vector.shape_cast %11 : vector<16xi32> to vector<16x1xi32>
    %cst_3 = arith.constant dense<0xFF800000> : vector<16xf32>
    %13 = vector.multi_reduction <maximumf>, %1, %cst_3 [1] : vector<16x4xf32> to vector<16xf32>
    %14 = vector.shape_cast %13 : vector<16xf32> to vector<16x1xf32>
    %15 = vector.broadcast %14 : vector<16x1xf32> to vector<16x4xf32>
    %16 = arith.subf %1, %15 : vector<16x4xf32>
    %17 = math.exp %16 : vector<16x4xf32>
    %cst_4 = arith.constant dense<0.000000e+00> : vector<16xf32>
    %18 = vector.multi_reduction <add>, %17, %cst_4 [1] : vector<16x4xf32> to vector<16xf32>
    %19 = vector.shape_cast %18 : vector<16xf32> to vector<16x1xf32>
    %20 = tpu.reciprocal %19 : vector<16x1xf32> -> vector<16x1xf32>
    %21 = vector.broadcast %20 : vector<16x1xf32> to vector<16x4xf32>
    %22 = arith.mulf %17, %21 : vector<16x4xf32>
    %23 = arith.truncf %22 : vector<16x4xf32> to vector<16x4xbf16>
    %c0_5 = arith.constant 0 : index
    %c0_6 = arith.constant 0 : index
    %24 = vector.load %arg3[%c0_5, %c0_6] : memref<16x4xbf16, #tpu.memory_space<vmem>>, vector<16x4xbf16>
    tpu.vector_store %arg3[%c0_5, %c0_6], %23 {strides = array<i32>} : memref<16x4xbf16, #tpu.memory_space<vmem>>, vector<16x4xbf16>,
    %25 = math.log %19 : vector<16x1xf32>
    %26 = arith.addf %14, %25 : vector<16x1xf32>
    %27 = vector.broadcast %12 : vector<16x1xi32> to vector<16x4xi32>
    %28 = arith.cmpi eq, %2, %27 : vector<16x4xi32>
    %cst_7 = arith.constant 0.000000e+00 : f32
    %29 = vector.broadcast %cst_7 : f32 to vector<16x4xf32>
    %30 = arith.select %28, %1, %29 : vector<16x4xi1>, vector<16x4xf32>
    %cst_8 = arith.constant dense<0.000000e+00> : vector<16xf32>
    %31 = vector.multi_reduction <add>, %30, %cst_8 [1] : vector<16x4xf32> to vector<16xf32>
    %32 = vector.shape_cast %31 : vector<16xf32> to vector<16x1xf32>
    %33 = arith.subf %26, %32 : vector<16x1xf32>
    %c2_i32 = arith.constant 2 : i32
    %34 = vector.broadcast %c2_i32 : i32 to vector<16x4xi32>
    %35 = arith.cmpi slt, %2, %34 : vector<16x4xi32>
    %cst_9 = arith.constant 0xFF800000 : f32
    %36 = vector.broadcast %cst_9 : f32 to vector<16x4xf32>
    %37 = arith.select %35, %1, %36 : vector<16x4xi1>, vector<16x4xf32>
    %cst_10 = arith.constant dense<0xFF800000> : vector<16xf32>
    %38 = vector.multi_reduction <maximumf>, %37, %cst_10 [1] : vector<16x4xf32> to vector<16xf32>
    %39 = vector.shape_cast %38 : vector<16xf32> to vector<16x1xf32>
    %40 = vector.broadcast %39 : vector<16x1xf32> to vector<16x4xf32>
    %41 = arith.cmpf oeq, %37, %40 : vector<16x4xf32>
    %c4_i32 = arith.constant 4 : i32
    %42 = vector.broadcast %c4_i32 : i32 to vector<16x4xi32>
    %43 = arith.select %41, %2, %42 : vector<16x4xi1>, vector<16x4xi32>
    %cst_11 = arith.constant dense<2147483647> : vector<16xi32>
    %44 = vector.multi_reduction <minsi>, %43, %cst_11 [1] : vector<16x4xi32> to vector<16xi32>
    %45 = vector.shape_cast %44 : vector<16xi32> to vector<16x1xi32>
    %c0_i32_12 = arith.constant 0 : i32
    %46 = vector.shape_cast %45 : vector<16x1xi32> to vector<16x1xi32>
    %47 = vector.broadcast %46 : vector<16x1xi32> to vector<16x16xi32>
    %48 = vector.broadcast %c0_i32_12 : i32 to vector<16x16xi32>
    %49 = arith.select %5, %47, %48 : vector<16x16xi1>, vector<16x16xi32>
    %cst_13 = arith.constant dense<0> : vector<16xi32>
    %50 = vector.multi_reduction <add>, %49, %cst_13 [0] : vector<16x16xi32> to vector<16xi32>
    %51 = vector.shape_cast %50 : vector<16xi32> to vector<1x16xi32>
    %c0_14 = arith.constant 0 : index
    %c0_15 = arith.constant 0 : index
    %52 = vector.load %arg4[%c0_14, %c0_15] : memref<1x16xi32, #tpu.memory_space<vmem>>, vector<1x16xi32>
    tpu.vector_store %arg4[%c0_14, %c0_15], %51 {strides = array<i32>} : memref<1x16xi32, #tpu.memory_space<vmem>>, vector<1x16xi32>,
    %cst_16 = arith.constant 0.000000e+00 : f32
    %53 = vector.shape_cast %33 : vector<16x1xf32> to vector<16x1xf32>
    %54 = vector.broadcast %53 : vector<16x1xf32> to vector<16x16xf32>
    %55 = vector.broadcast %cst_16 : f32 to vector<16x16xf32>
    %56 = arith.select %5, %54, %55 : vector<16x16xi1>, vector<16x16xf32>
    %cst_17 = arith.constant dense<0.000000e+00> : vector<16xf32>
    %57 = vector.multi_reduction <add>, %56, %cst_17 [0] : vector<16x16xf32> to vector<16xf32>
    %58 = vector.shape_cast %57 : vector<16xf32> to vector<1x16xf32>
    %c0_18 = arith.constant 0 : index
    %c0_19 = arith.constant 0 : index
    %59 = vector.load %arg5[%c0_18, %c0_19] : memref<1x16xf32, #tpu.memory_space<vmem>>, vector<1x16xf32>
    tpu.vector_store %arg5[%c0_18, %c0_19], %58 {strides = array<i32>} : memref<1x16xf32, #tpu.memory_space<vmem>>, vector<1x16xf32>,
    return
  }
  func.func @transform_0(%arg0: i32) -> (i32, i32) {
    %c0_i32 = arith.constant 0 : i32
    %c0_i32_0 = arith.constant 0 : i32
    return %arg0, %c0_i32 : i32, i32
  }
  func.func @transform_1(%arg0: i32) -> (i32, i32) {
    %c0_i32 = arith.constant 0 : i32
    %c0_i32_0 = arith.constant 0 : i32
    return %c0_i32, %arg0 : i32, i32
  }
  func.func @transform_2(%arg0: i32) -> (i32, i32) {
    %c0_i32 = arith.constant 0 : i32
    %c0_i32_0 = arith.constant 0 : i32
    return %arg0, %c0_i32 : i32, i32
  }
  func.func @transform_3(%arg0: i32) -> (i32, i32) {
    %c0_i32 = arith.constant 0 : i32
    %c0_i32_0 = arith.constant 0 : i32
    return %c0_i32, %arg0 : i32, i32
  }
  func.func @transform_4(%arg0: i32) -> (i32, i32) {
    %c0_i32 = arith.constant 0 : i32
    %c0_i32_0 = arith.constant 0 : i32
    return %c0_i32, %arg0 : i32, i32
  }
}

</mosaic_0001>

<llo_original>
// kernel: tpu_custom_call.1
$region0: #{tpu_custom_call.1}
  #allocation0 [shape = 'u32[]', space=smem, size = 0x4, offset = 0x4, fixed_abs, tag = 'smem constant byte address 0x4 - core index']
  #allocation1 [shape = 'u32[72,128]{1,0:T(1,128)}', space=vmem, size = 0x9000, scoped, tag = 'internal scratch']
  %s0 = inlined_call_operand.vmem [shape: bf16[16,4], index: 0, kind: input, shape index: {}]
  %s1 = inlined_call_operand.vmem [shape: s32[1,16], index: 1, kind: input, shape index: {}]
  %s2 = inlined_call_operand.vmem [shape: bf16[16,4], index: 2, kind: output, shape index: {0}]
  %s3 = inlined_call_operand.hbm [shape: s32[1,16], index: 3, kind: output, shape index: {1}]
  %s4 = inlined_call_operand.hbm [shape: f32[1,16], index: 4, kind: output, shape index: {2}]
  %5 = xla_tuple %s2, %s3, %s4
  %s6 = sld [smem:[#allocation0]]
  $region34: #{tpu_custom_call.1} parent=0
    _
  %s8 = ssub.s32 1, %s6
  %s9 = scalar_select 0, %s8, %s6
  $region1: #{tpu_custom_call.1} parent=0
    #allocation2 [shape = 'u8[512]{0}', space=vmem, size = 0x400, scoped, tag = 'output window, operand 1, single buffered']
    #allocation3 [shape = 's32[1]{0}', space=sflag, size = 0x4, scoped, tag = 'scoped memory for tpu_custom_call.1']
    #allocation4 [shape = 'u8[512]{0}', space=vmem, size = 0x400, scoped, tag = 'output window, operand 2, single buffered']
    #allocation5 [shape = 's32[1]{0}', space=sflag, size = 0x4, scoped, tag = 'scoped memory for tpu_custom_call.1']
    %10 = vsyncpa [#allocation3], 0
    %11 = vsyncpa [#allocation5], 0
    // Predicated region
    $region2: #{tpu_custom_call.1} parent=1 // pred_check
      _
    $region3: #{tpu_custom_call.1} parent=1 // pred_check_branch
      %13 = sbr.rel (0) target = $region5
    $region4: #{tpu_custom_call.1} parent=1 // pred_region
      _
    $region5: #{tpu_custom_call.1} parent=1 // pred_fallthru
      _
    // Predicated region
    $region6: #{tpu_custom_call.1} parent=1 // pred_check
      _
    $region7: #{tpu_custom_call.1} parent=1 // pred_check_branch
      %15 = sbr.rel (0) target = $region9
    $region8: #{tpu_custom_call.1} parent=1 // pred_region
      _
    $region9: #{tpu_custom_call.1} parent=1 // pred_fallthru
      _
    %v16 = vld [vmem:[%s0] sm:$0xf]
    %v17 = vld [vmem:[%s0 + $0x4] sm:$0xf]
    %v18 = vunpack.c.l.bf16 %v16
    %v19 = vunpack.c.l.bf16 %v17
    %v20 = vlaneseq
    %v21 = vand.u32 %v20, 127
    %v22 = vlaneseq
    %v23 = vshrl.u32 %v22, 7
    %v24 = vadd.s32 %v23, 8
    %vm25 = vcmp.eq.s32.totalorder %v23, %v21
    %vm26 = vcmp.eq.s32.totalorder %v24, %v21
    %v27 = vld [vmem:[%s1] sm:$0x1]
    %v28 = vperm.slane %v27, 0
    %v29 = vsel %vm25, %v28, 0
    %v30 = vsel %vm26, %v28, 0
    %vm31 = vcmask 130048
    %v32 = vsel %vm31, %v29, 0
    %v33 = vand.u32 %v32, 65535
    %v34 = vshrl.u32 %v32, 16
    %v35 = vcvt.s32.f32 %v33
    %v36 = vcvt.s32.f32 %v34
    %37 = vadd.xlane.f32.xlu0 %v35
    %v38 = vpop.xlane.xlu0 %37
    %39 = vadd.xlane.f32.xlu0 %v36
    %v40 = vpop.xlane.xlu0 %39
    %v41 = vcvt.f32.s32 %v38
    %v42 = vcvt.f32.s32 %v40
    %v43 = vshll.u32 %v42, 16
    %v44 = vadd.s32 %v43, %v41
    %v45 = vsel %vm31, %v30, 0
    %v46 = vand.u32 %v45, 65535
    %v47 = vshrl.u32 %v45, 16
    %v48 = vcvt.s32.f32 %v46
    %v49 = vcvt.s32.f32 %v47
    %50 = vadd.xlane.f32.xlu0 %v48
    %v51 = vpop.xlane.xlu0 %50
    %52 = vadd.xlane.f32.xlu0 %v49
    %v53 = vpop.xlane.xlu0 %52
    %v54 = vcvt.f32.s32 %v51
    %v55 = vcvt.f32.s32 %v53
    %v56 = vshll.u32 %v55, 16
    %v57 = vadd.s32 %v56, %v54
    %vm58 = vcmask 31744
    %v59 = vsel %vm58, %v18, -inf
    %60 = vmax.xlane.f32.xlu0 %v59
    %v61 = vpop.xlane.xlu0 %60
    %v62 = vsel %vm58, %v19, -inf
    %63 = vmax.xlane.f32.xlu0 %v62
    %v64 = vpop.xlane.xlu0 %63
    %v65 = vsub.f32 %v18, %v61
    %v66 = vsub.f32 %v19, %v64
    %v67 = vmul.f32 %v65, 1.442695
    %v68 = vpow.pop %v67
    %v69 = vmul.f32 %v66, 1.442695
    %v70 = vpow.pop %v69
    %v71 = vsel %vm58, %v68, 0.0
    %72 = vadd.xlane.f32.xlu0 %v71
    %v73 = vpop.xlane.xlu0 %72
    %v74 = vsel %vm58, %v70, 0.0
    %75 = vadd.xlane.f32.xlu0 %v74
    %v76 = vpop.xlane.xlu0 %75
    %v77 = vrcp.pop %v73
    %v78 = vmul.f32 %v73, %v77
    %v79 = vsub.f32 1.0, %v78
    %v80 = vmul.f32 %v77, %v79
    %v81 = vadd.f32 %v77, %v80
    %vm82 = vweird.f32 %v73
    %vm83 = vweird.f32 %v77
    %vm84 = vmor %vm82, %vm83
    %v85 = vsel %vm84, %v77, %v81
    %v86 = vand.u32 2147483647, %v73
    %vm87 = vcmp.eq.f32.partialorder %v86, 8.507059e+37
    %v88 = vand.u32 %v73, 2147483648
    %v89 = vor.u32 1.1754944e-38, %v88
    %v90 = vsel %vm87, %v89, %v85
    %v91 = vrcp.pop %v76
    %v92 = vmul.f32 %v76, %v91
    %v93 = vsub.f32 1.0, %v92
    %v94 = vmul.f32 %v91, %v93
    %v95 = vadd.f32 %v91, %v94
    %vm96 = vweird.f32 %v76
    %vm97 = vweird.f32 %v91
    %vm98 = vmor %vm96, %vm97
    %v99 = vsel %vm98, %v91, %v95
    %v100 = vand.u32 2147483647, %v76
    %vm101 = vcmp.eq.f32.partialorder %v100, 8.507059e+37
    %v102 = vand.u32 %v76, 2147483648
    %v103 = vor.u32 1.1754944e-38, %v102
    %v104 = vsel %vm101, %v103, %v99
    %v105 = vmul.f32 %v68, %v90
    %v106 = vmul.f32 %v70, %v104
    %v107 = vpack.c.bf16 %v105, %v105
    %v108 = vpack.c.bf16 %v106, %v106
    %vm109 = vcmask 27648
    %110 = vst.msk [vmem:[%s2] sm:$0xf] %vm109, %v107
    %111 = vst.msk [vmem:[%s2 + $0x4] sm:$0xf] %vm109, %v108
    %v112 = vlog2.pop %v73
    %v113 = vmul.f32 %v112, 0.6931472
    %v114 = vlog2.pop %v76
    %v115 = vmul.f32 %v114, 0.6931472
    %v116 = vadd.f32 %v61, %v113
    %v117 = vadd.f32 %v64, %v115
    %vm118 = vcmp.eq.s32.totalorder %v21, %v44
    %vm119 = vcmp.eq.s32.totalorder %v21, %v57
    %v120 = vsel %vm118, %v18, 0.0
    %v121 = vsel %vm119, %v19, 0.0
    %v122 = vsel %vm58, %v120, 0.0
    %123 = vadd.xlane.f32.xlu0 %v122
    %v124 = vpop.xlane.xlu0 %123
    %v125 = vsel %vm58, %v121, 0.0
    %126 = vadd.xlane.f32.xlu0 %v125
    %v127 = vpop.xlane.xlu0 %126
    %v128 = vsub.f32 %v116, %v124
    %v129 = vsub.f32 %v117, %v127
    %vm130 = vcmp.lt.s32.totalorder %v21, 2
    %v131 = vsel %vm130, %v18, -inf
    %v132 = vsel %vm130, %v19, -inf
    %v133 = vsel %vm58, %v131, -inf
    %134 = vmax.xlane.f32.xlu0 %v133
    %v135 = vpop.xlane.xlu0 %134
    %v136 = vsel %vm58, %v132, -inf
    %137 = vmax.xlane.f32.xlu0 %v136
    %v138 = vpop.xlane.xlu0 %137
    %vm139 = vcmp.eq.f32.partialorder %v131, %v135
    %vm140 = vcmp.eq.f32.partialorder %v132, %v138
    %v141 = vsel %vm139, %v21, 4
    %v142 = vsel %vm140, %v21, 4
    %v143 = vsel %vm58, %v141, 2147483647
    %v144 = vand.u32 %v143, 65535
    %v145 = vshra.s32 %v143, 16
    %v146 = vcvt.s32.f32 %v144
    %v147 = vcvt.s32.f32 %v145
    %148 = vmin.xlane.f32.xlu0 %v147
    %v149 = vpop.xlane.xlu0 %148
    %vm150 = vcmp.eq.f32.partialorder %v147, %v149
    %v151 = vsel %vm150, %v146, inf
    %152 = vmin.xlane.f32.xlu0 %v151
    %v153 = vpop.xlane.xlu0 %152
    %v154 = vcvt.f32.s32 %v153
    %v155 = vcvt.f32.s32 %v149
    %v156 = vshll.u32 %v155, 16
    %v157 = vadd.s32 %v156, %v154
    %v158 = vsel %vm58, %v142, 2147483647
    %v159 = vand.u32 %v158, 65535
    %v160 = vshra.s32 %v158, 16
    %v161 = vcvt.s32.f32 %v159
    %v162 = vcvt.s32.f32 %v160
    %163 = vmin.xlane.f32.xlu0 %v162
    %v164 = vpop.xlane.xlu0 %163
    %vm165 = vcmp.eq.f32.partialorder %v162, %v164
    %v166 = vsel %vm165, %v161, inf
    %167 = vmin.xlane.f32.xlu0 %v166
    %v168 = vpop.xlane.xlu0 %167
    %v169 = vcvt.f32.s32 %v168
    %v170 = vcvt.f32.s32 %v164
    %v171 = vshll.u32 %v170, 16
    %v172 = vadd.s32 %v171, %v169
    %v173 = vsel %vm25, %v157, 0
    %v174 = vsel %vm26, %v172, 0
    %v175 = vsel %vm31, %v173, 0
    %v176 = vsel %vm31, %v174, 0
    %v177 = vadd.s32 %v175, %v176
    %v178 = vrot.slane %v177, 4
    %v179 = vadd.s32 %v177, %v178
    %v180 = vrot.slane %v179, 2
    %v181 = vadd.s32 %v179, %v180
    %v182 = vrot.slane %v181, 1
    %v183 = vadd.s32 %v181, %v182
    %vm184 = vcmask 122880
    %185 = vst.msk [vmem:[#allocation2] sm:$0x1] %vm184, %v183
    %v186 = vsel %vm25, %v128, 0.0
    %v187 = vsel %vm26, %v129, 0.0
    %v188 = vsel %vm31, %v186, 0.0
    %v189 = vsel %vm31, %v187, 0.0
    %v190 = vadd.f32 %v188, %v189
    %v191 = vrot.slane %v190, 4
    %v192 = vadd.f32 %v190, %v191
    %v193 = vrot.slane %v192, 2
    %v194 = vadd.f32 %v192, %v193
    %v195 = vrot.slane %v194, 1
    %v196 = vadd.f32 %v194, %v195
    %197 = vst.msk [vmem:[#allocation4] sm:$0x1] %vm184, %v196
    // Predicated region
    $region10: #{tpu_custom_call.1} parent=1 // pred_check
      _
    $region11: #{tpu_custom_call.1} parent=1 // pred_check_branch
      %199 = sbr.rel (0) target = $region13
    $region12: #{tpu_custom_call.1} parent=1 // pred_region
      _
    $region13: #{tpu_custom_call.1} parent=1 // pred_fallthru
      _
    // Predicated region
    $region14: #{tpu_custom_call.1} parent=1 // pred_check
      _
    $region15: #{tpu_custom_call.1} parent=1 // pred_check_branch
      %201 = sbr.rel (0) target = $region17
    $region16: #{tpu_custom_call.1} parent=1 // pred_region
      %203 = vsyncadd [#allocation3], 0
      %s205 = sshll.u32 [#allocation2], 4
      %s206 = int_to_ptr.vmem [resolvable:$true] %s205
      %s207 = sshll.u32 %s3, 4
      %s208 = int_to_ptr.hbm [resolvable:$true] %s207
      %210 = dma.vmem_to_hbm [thread:$0]  %s206, 16, %s208, [#allocation3]
    $region17: #{tpu_custom_call.1} parent=1 // pred_fallthru
      _
    // Predicated region
    $region18: #{tpu_custom_call.1} parent=1 // pred_check
      _
    $region19: #{tpu_custom_call.1} parent=1 // pred_check_branch
      %212 = sbr.rel (0) target = $region21
    $region20: #{tpu_custom_call.1} parent=1 // pred_region
      %214 = vsyncadd [#allocation5], 0
      %s216 = sshll.u32 [#allocation4], 4
      %s217 = int_to_ptr.vmem [resolvable:$true] %s216
      %s218 = sshll.u32 %s4, 4
      %s219 = int_to_ptr.hbm [resolvable:$true] %s218
      %221 = dma.vmem_to_hbm [thread:$0]  %s217, 16, %s219, [#allocation5]
    $region21: #{tpu_custom_call.1} parent=1 // pred_fallthru
      _
    // Predicated region
    $region22: #{tpu_custom_call.1} parent=1 // pred_check
      _
    $region23: #{tpu_custom_call.1} parent=1 // pred_check_branch
      %223 = sbr.rel (0) target = $region25
    $region24: #{tpu_custom_call.1} parent=1 // pred_region
      _
    $region25: #{tpu_custom_call.1} parent=1 // pred_fallthru
      _
    // Predicated region
    $region26: #{tpu_custom_call.1} parent=1 // pred_check
      _
    $region27: #{tpu_custom_call.1} parent=1 // pred_check_branch
      %225 = sbr.rel (0) target = $region29
    $region28: #{tpu_custom_call.1} parent=1 // pred_region
      %227 = dma.done [#allocation3], 16
    $region29: #{tpu_custom_call.1} parent=1 // pred_fallthru
      _
    // Predicated region
    $region30: #{tpu_custom_call.1} parent=1 // pred_check
      _
    $region31: #{tpu_custom_call.1} parent=1 // pred_check_branch
      %229 = sbr.rel (0) target = $region33
    $region32: #{tpu_custom_call.1} parent=1 // pred_region
      %231 = dma.done [#allocation5], 16
    $region33: #{tpu_custom_call.1} parent=1 // pred_fallthru
      _
    %232 = vsyncpa [#allocation3], 1
    %233 = vsyncpa [#allocation5], 1

</llo_original>
